<compile_context>
chip_gen: v7x
topology: tpu7x:2x2x1
jax: 0.10.0
libtpu: 0.0.40
codegen_flags: <defaults>
</compile_context>

<pallas_src>
import functools

import numpy as np
import jax
import jax.numpy as jnp
from jax import lax
from jax.experimental import pallas as pl
from jax.experimental.pallas import tpu as pltpu


_VMEM_LIMIT_BYTES = 32 * 1024 * 1024      # <= defaults on v6e/v7x, raises v5e's 16 MiB default
_FUSED_PATH_MAX_BYTES = 12 * 1024 * 1024  # VMEM budget for the single-call resident path
_TILE_CAP = 1024


# ----------------------------------------------------------------------------
# Small helpers
# ----------------------------------------------------------------------------
def _round_up(x: int, mult: int) -> int:
    return (x + mult - 1) // mult * mult


def _choose_tile(dim: int, cap: int = _TILE_CAP):
    """Return (tile, padded_dim): tile is a multiple of 128 <= cap, padded_dim a
    multiple of tile >= dim.  Prefers zero extra padding; accepts a little padding
    rather than degenerate 128-wide tiles (short DMAs + per-step overhead)."""
    d_pad = _round_up(dim, 128)
    if d_pad <= cap:
        return d_pad, d_pad
    best = 128
    for t in range(cap, 127, -128):
        if d_pad % t == 0:
            best = t
            break
    if best >= 512:
        return best, d_pad
    return 512, _round_up(d_pad, 512)


_FP8_WEIGHTS_OK = None


def _fp8_weights_supported() -> bool:
    """Probe once whether this chip's Mosaic can load fp8 tiles and upcast to bf16."""
    global _FP8_WEIGHTS_OK
    if _FP8_WEIGHTS_OK is None:
        try:
            def _probe(w_ref, o_ref):
                o_ref[...] = w_ref[...].astype(jnp.bfloat16).astype(jnp.float32)

            w = jnp.full((32, 128), 1.5, jnp.float8_e4m3fn)
            out = pl.pallas_call(
                _probe, out_shape=jax.ShapeDtypeStruct((32, 128), jnp.float32))(w)
            _FP8_WEIGHTS_OK = bool(jnp.allclose(jax.block_until_ready(out), 1.5))
        except Exception:
            _FP8_WEIGHTS_OK = False
    return _FP8_WEIGHTS_OK


# ----------------------------------------------------------------------------
# Parameter construction helpers (deterministic, host-side "checkpoint")
# ----------------------------------------------------------------------------
def merge_col_val(cols_i16: np.ndarray, vals_f16: np.ndarray) -> np.ndarray:
    """Pack int16 column index (low 16 bits) + fp16 value bits (high 16 bits)."""
    cols_u = cols_i16.astype(np.uint16).astype(np.uint32)
    vals_u = vals_f16.astype(np.float16).view(np.uint16).astype(np.uint32)
    return (cols_u | (vals_u << 16)).astype(np.uint32)


def dense_to_csr_packed(mat_f16: np.ndarray):
    """Dense fp16 matrix -> (row_offsets int32, packed col_vals uint32)."""
    rows, cols = np.nonzero(mat_f16)
    vals = mat_f16[rows, cols]
    counts = np.bincount(rows, minlength=mat_f16.shape[0])
    row_offsets = np.zeros(mat_f16.shape[0] + 1, dtype=np.int32)
    row_offsets[1:] = np.cumsum(counts)
    col_vals = merge_col_val(cols.astype(np.int16), vals.astype(np.float16))
    return row_offsets.astype(np.int32), col_vals


def dequant_csr(row_offsets, col_vals, num_rows: int, num_cols: int) -> jnp.ndarray:
    """Unpack CSR(row_offsets, packed col_vals) back to a dense float32 matrix."""
    packed = jnp.asarray(col_vals, dtype=jnp.uint32)
    cols = (packed & jnp.uint32(0xFFFF)).astype(jnp.int32)
    val_bits = (packed >> jnp.uint32(16)).astype(jnp.uint16)
    vals = lax.bitcast_convert_type(val_bits, jnp.float16).astype(jnp.float32)
    counts = jnp.diff(jnp.asarray(row_offsets, dtype=jnp.int32))
    rows = jnp.repeat(
        jnp.arange(num_rows, dtype=jnp.int32),
        counts,
        total_repeat_length=packed.shape[0],
    )
    dense = jnp.zeros((num_rows, num_cols), dtype=jnp.float32)
    return dense.at[rows, cols].set(vals)


# ----------------------------------------------------------------------------
# Pallas kernels
# ----------------------------------------------------------------------------
def _mm_acc_kernel(lhs_ref, rhs_ref, out_ref, acc_ref):
    """Tiled matmul step with f32 accumulator.

    lhs_ref: (kt, B, tk) f32, fully resident (fetched once per call).
    rhs_ref: (tk, tn) fp8/bf16 weight tile streamed from HBM.
    """
    l = pl.program_id(1)

    @pl.when(l == 0)
    def _init():
        acc_ref[...] = jnp.zeros_like(acc_ref)

    lhs = lhs_ref[l].astype(jnp.bfloat16)               # tiny (B, tk) cast only
    acc_ref[...] += jnp.dot(lhs, rhs_ref[...].astype(jnp.bfloat16),
                            preferred_element_type=jnp.float32)

    @pl.when(l == pl.num_programs(1) - 1)
    def _finalize():
        out_ref[...] = acc_ref[...].astype(out_ref.dtype)


def _mm_noacc_kernel(lhs_ref, rhs_ref, out_ref):
    """Whole reduction fits one tile: no accumulator, 1-D fully parallel grid."""
    out_ref[...] = jnp.dot(lhs_ref[...].astype(jnp.bfloat16),
                           rhs_ref[...].astype(jnp.bfloat16),
                           preferred_element_type=jnp.float32).astype(out_ref.dtype)


def _fused_kernel(x_ref, bt_ref, at_ref, y_ref):
    """Small-layer path: both weight matrices resident in VMEM, one ungridded call."""
    x = x_ref[...].astype(jnp.bfloat16)
    t = jnp.dot(x, bt_ref[...].astype(jnp.bfloat16),
                preferred_element_type=jnp.float32)       # f32 workspace stays in VMEM
    y_ref[...] = jnp.dot(t.astype(jnp.bfloat16), at_ref[...].astype(jnp.bfloat16),
                         preferred_element_type=jnp.float32)


def _tiled_matmul(lhs, rhs, *, tk, tn, out_dtype):
    """(B, K) f32 @ (K, N) fp8/bf16 -> (B, N) out_dtype, reduction axis innermost."""
    B, K = lhs.shape
    K2, N = rhs.shape
    assert K == K2 and K % tk == 0 and N % tn == 0 and B % 16 == 0

    # v7x megacore: avoid a single-tile "parallel" axis when it can be split evenly.
    if N // tn == 1 and tn % 256 == 0:
        tn //= 2
    nt, kt = N // tn, K // tk

    if kt == 1:
        return pl.pallas_call(
            _mm_noacc_kernel,
            out_shape=jax.ShapeDtypeStruct((B, N), out_dtype),
            grid=(nt,),
            in_specs=[pl.BlockSpec((B, K), lambda j: (0, 0)),     # resident activations
                      pl.BlockSpec((K, tn), lambda j: (0, j))],   # streamed weight tile
            out_specs=pl.BlockSpec((B, tn), lambda j: (0, j)),
            compiler_params=pltpu.CompilerParams(
                dimension_semantics=("parallel",),
                vmem_limit_bytes=_VMEM_LIMIT_BYTES),
        )(lhs, rhs)

    # Resident activations as a (kt, B, tk) slab: fetched once (constant block index),
    # indexed along the leading axis in-kernel -> no per-step activation re-DMA.
    lhs3 = lhs.reshape(B, kt, tk).transpose(1, 0, 2)
    return pl.pallas_call(
        _mm_acc_kernel,
        out_shape=jax.ShapeDtypeStruct((B, N), out_dtype),
        grid=(nt, kt),
        in_specs=[pl.BlockSpec((kt, B, tk), lambda j, l: (0, 0, 0)),
                  pl.BlockSpec((tk, tn), lambda j, l: (l, j))],
        out_specs=pl.BlockSpec((B, tn), lambda j, l: (0, j)),
        scratch_shapes=[pltpu.VMEM((B, tn), jnp.float32)],
        compiler_params=pltpu.CompilerParams(
            dimension_semantics=("parallel", "arbitrary"),
            vmem_limit_bytes=_VMEM_LIMIT_BYTES),
    )(lhs3, rhs)


# ----------------------------------------------------------------------------
# Jitted forward: pad -> (fused | two tiled matmuls) -> slice + single f16 rounding
# ----------------------------------------------------------------------------
@functools.partial(jax.jit, static_argnames=("m_out", "use_fused", "t_n", "t_k", "t_m"))
def _sparsified_forward(x, bt_pad, at_pad, *, m_out, use_fused, t_n, t_k, t_m):
    batch, n = x.shape[1], x.shape[2]
    n_pad, k_pad = bt_pad.shape
    m_pad = at_pad.shape[1]
    B = _round_up(max(batch, 1), 16)   # >=16 sublanes: bf16 operands tile-native everywhere

    x2 = jnp.zeros((B, n_pad), jnp.float32).at[:batch, :n].set(x[0].astype(jnp.float32))

    if use_fused:
        y = pl.pallas_call(
            _fused_kernel,
            out_shape=jax.ShapeDtypeStruct((B, m_pad), jnp.float32),
            compiler_params=pltpu.CompilerParams(vmem_limit_bytes=_VMEM_LIMIT_BYTES),
        )(x2, bt_pad, at_pad)
    else:
        # workspace t = B @ x, stored as (B, k_pad) = x @ B^T, f32 (module semantics)
        t = _tiled_matmul(x2, bt_pad, tk=t_n, tn=t_k, out_dtype=jnp.float32)
        # y = A @ t, stored as (B, m_pad) = t @ A^T; f32 out (tiny) -> single f16 rounding
        y = _tiled_matmul(t, at_pad, tk=t_k, tn=t_m, out_dtype=jnp.float32)

    return y[:batch, :m_out].astype(jnp.float16)[None]    # (1, batch, m) f16


# ----------------------------------------------------------------------------
# Module wrapper
# ----------------------------------------------------------------------------
class SparsifiedLinearFP8Pallas:
    def __init__(self, m, n, k, a_row_offsets, a_col_vals,
                 b_row_offsets, b_col_vals, non_zero_rows, fused=None):
        self.m, self.n, self.k = m, n, k
        self.a_row_offsets = jnp.asarray(a_row_offsets, jnp.int32)
        self.a_col_vals = jnp.asarray(a_col_vals, jnp.uint32)
        self.b_row_offsets = jnp.asarray(b_row_offsets, jnp.int32)
        self.b_col_vals = jnp.asarray(b_col_vals, jnp.uint32)
        self.non_zero_rows = int(non_zero_rows)
        self.fused = fused   # None = auto, True = force fused, False = force tiled

        # ---- one-time dequantization + layout prep (hoisted out of forward) ----
        # fp8-e4m3 values are the module's stored precision -> lossless in fp8 or bf16.
        self.weight_dtype = jnp.float8_e4m3fn if _fp8_weights_supported() else jnp.bfloat16
        a_dense, b_dense = self.dequant_dense()            # f32 (m,k), (k,n)
        self.t_n, n_pad = _choose_tile(n)
        self.t_k, k_pad = _choose_tile(k)
        self.t_m, m_pad = _choose_tile(m)
        bt = jnp.zeros((n_pad, k_pad), jnp.float32).at[:n, :k].set(b_dense.T)
        at = jnp.zeros((k_pad, m_pad), jnp.float32).at[:k, :m].set(a_dense.T)
        self.bt_pad = jax.block_until_ready(bt.astype(self.weight_dtype))
        self.at_pad = jax.block_until_ready(at.astype(self.weight_dtype))

    def dequant_dense(self):
        """Dense f32 A (m,k) and B (k,n) reconstructed from the packed CSR."""
        a_dense = dequant_csr(self.a_row_offsets, self.a_col_vals, self.m, self.k)
        b_nz = dequant_csr(self.b_row_offsets, self.b_col_vals,
                           self.non_zero_rows, self.n)
        if self.non_zero_rows < self.k:
            # rows past non_zero_rows are all-zero by construction in from_legacy
            b_dense = jnp.zeros((self.k, self.n), jnp.float32).at[
                :self.non_zero_rows, :].set(b_nz)
        else:
            b_dense = b_nz
        return a_dense, b_dense

    def _use_fused(self, batch: int) -> bool:
        if self.fused is not None:
            return bool(self.fused)
        B = _round_up(max(batch, 1), 16)
        wb = jnp.dtype(self.weight_dtype).itemsize
        n_pad, k_pad = self.bt_pad.shape
        m_pad = self.at_pad.shape[1]
        w_elems = n_pad * k_pad + k_pad * m_pad
        # weights + in-kernel bf16 upcast copies + activations/workspace/output (f32)
        est = w_elems * (wb + 2) + B * (n_pad + k_pad + m_pad) * 4
        return est <= _FUSED_PATH_MAX_BYTES

    def __call__(self, x: jnp.ndarray) -> jnp.ndarray:
        # x: (1, batch, n) float16  ->  y: (1, batch, m) float16
        assert x.ndim == 3 and x.shape[0] == 1 and x.shape[2] == self.n
        return _sparsified_forward(
            x, self.bt_pad, self.at_pad, m_out=self.m,
            use_fused=self._use_fused(x.shape[1]),
            t_n=self.t_n, t_k=self.t_k, t_m=self.t_m)


# ----------------------------------------------------------------------------
# Deterministic synthetic parameter construction + reference check
# ----------------------------------------------------------------------------
def build_module(m, n, k, key, fused=None):
    ka, kam, kb, kbm = jax.random.split(key, 4)
    a_vals = jax.random.normal(ka, (m, k), jnp.float32)
    a_mask = jax.random.bernoulli(kam, 0.30, (m, k))
    b_vals = jax.random.normal(kb, (k, n), jnp.float32)
    b_mask = jax.random.bernoulli(kbm, 0.30, (k, n))
    # ensure every row of B has at least one nonzero -> non_zero_rows == k
    b_mask = b_mask.at[jnp.arange(k), jnp.arange(k) % n].set(True)

    a_dense = jnp.where(a_mask, a_vals, 0.0)
    b_dense = jnp.where(b_mask, b_vals, 0.0)

    # FP8 quantization of the stored values (the "FP8" in SparsifiedLinearFP8)
    a_q = np.asarray(a_dense.astype(jnp.float8_e4m3fn).astype(jnp.float16))
    b_q = np.asarray(b_dense.astype(jnp.float8_e4m3fn).astype(jnp.float16))

    a_row_offsets, a_col_vals = dense_to_csr_packed(a_q)
    b_row_offsets, b_col_vals = dense_to_csr_packed(b_q)
    return SparsifiedLinearFP8Pallas(m, n, k, a_row_offsets, a_col_vals,
                                     b_row_offsets, b_col_vals,
                                     non_zero_rows=k, fused=fused)


def _check(mod, x, y, tol=2e-2):
    # reference: same dequantized dense matrices, f32 HIGHEST double matmul,
    # single f32 -> f16 rounding (matches the module's f32-workspace semantics).
    a_dense, b_dense = mod.dequant_dense()
    xf = x[0].astype(jnp.float32)
    t_ref = jnp.dot(xf, b_dense.T, precision=lax.Precision.HIGHEST)
    y_ref = jnp.dot(t_ref, a_dense.T,
                    precision=lax.Precision.HIGHEST).astype(jnp.float16)[None]
    assert y.shape == (1, x.shape[1], mod.m) and y.dtype == jnp.float16
    y_np = np.asarray(y, np.float32)
    yr_np = np.asarray(y_ref, np.float32)
    rel = float(np.max(np.abs(y_np - yr_np)) / (np.max(np.abs(yr_np)) + 1e-6))
    assert rel < tol, f"max error relative to output peak = {rel}"


if __name__ == "__main__":
    key = jax.random.PRNGKey(0)
    kmod1, kmod2, kx1, kx2 = jax.random.split(key, 4)

    # Test 1: tiny layer with awkward dims -> padding paths + single fused call.
    m1, n1, k1 = 192, 320, 256
    mod1 = build_module(m1, n1, k1, kmod1)
    x1 = jax.random.normal(kx1, (1, 3, n1), jnp.float32).astype(jnp.float16)
    y1 = jax.block_until_ready(mod1(x1))
    _check(mod1, x1, y1)

    # Test 2: force the tiled two-call path (exercises both the accumulating and the
    # single-reduction-tile kernels with non-power-of-two 640-wide tiles).
    m2, n2, k2 = 640, 1280, 640
    mod2 = build_module(m2, n2, k2, kmod2, fused=False)
    x2 = jax.random.normal(kx2, (1, 5, n2), jnp.float32).astype(jnp.float16)
    y2 = jax.block_until_ready(mod2(x2))
    _check(mod2, x2, y2)

    print("KERNEL_OK")
</pallas_src>

<mosaic_0001>
module attributes {stable_mosaic.version = 11 : i64} {
  func.func @_probe(%arg0: memref<32x128xf8E4M3FN, #tpu.memory_space<vmem>>, %arg1: memref<32x128xf32, #tpu.memory_space<vmem>>) attributes {dimension_semantics = [], scalar_prefetch = 0 : i64, scratch_operands = 0 : i64, tpu.core_type = #tpu.core_type<tc>} {
    %c0 = arith.constant 0 : index
    %c0_0 = arith.constant 0 : index
    %0 = vector.load %arg0[%c0, %c0_0] : memref<32x128xf8E4M3FN, #tpu.memory_space<vmem>>, vector<32x128xf8E4M3FN>
    %1 = arith.extf %0 : vector<32x128xf8E4M3FN> to vector<32x128xbf16>
    %2 = arith.extf %1 : vector<32x128xbf16> to vector<32x128xf32>
    %c0_1 = arith.constant 0 : index
    %c0_2 = arith.constant 0 : index
    %3 = vector.load %arg1[%c0_1, %c0_2] : memref<32x128xf32, #tpu.memory_space<vmem>>, vector<32x128xf32>
    tpu.vector_store %arg1[%c0_1, %c0_2], %2 {strides = array<i32>} : memref<32x128xf32, #tpu.memory_space<vmem>>, vector<32x128xf32>,
    return
  }
}

module attributes {stable_mosaic.version = 11 : i64} {
  func.func @_fused_kernel(%arg0: memref<16x384xf32, #tpu.memory_space<vmem>>, %arg1: memref<384x256xbf16, #tpu.memory_space<vmem>>, %arg2: memref<256x256xbf16, #tpu.memory_space<vmem>>, %arg3: memref<16x256xf32, #tpu.memory_space<vmem>>) attributes {dimension_semantics = [], scalar_prefetch = 0 : i64, scratch_operands = 0 : i64, tpu.core_type = #tpu.core_type<tc>} {
    %c0 = arith.constant 0 : index
    %c0_0 = arith.constant 0 : index
    %0 = vector.load %arg0[%c0, %c0_0] : memref<16x384xf32, #tpu.memory_space<vmem>>, vector<16x384xf32>
    %1 = arith.truncf %0 : vector<16x384xf32> to vector<16x384xbf16>
    %c0_1 = arith.constant 0 : index
    %c0_2 = arith.constant 0 : index
    %2 = vector.load %arg1[%c0_1, %c0_2] : memref<384x256xbf16, #tpu.memory_space<vmem>>, vector<384x256xbf16>
    %cst = arith.constant dense<0.000000e+00> : vector<16x256xf32>
    %3 = tpu.matmul %1, %2, %cst {dimension_numbers = #tpu.dot_dimension_numbers<[1], [0], [0], [1], [0, 0, 1, 1], [], []>} : vector<16x384xbf16>, vector<384x256xbf16>, vector<16x256xf32> -> vector<16x256xf32>
    %4 = arith.truncf %3 : vector<16x256xf32> to vector<16x256xbf16>
    %c0_3 = arith.constant 0 : index
    %c0_4 = arith.constant 0 : index
    %5 = vector.load %arg2[%c0_3, %c0_4] : memref<256x256xbf16, #tpu.memory_space<vmem>>, vector<256x256xbf16>
    %cst_5 = arith.constant dense<0.000000e+00> : vector<16x256xf32>
    %6 = tpu.matmul %4, %5, %cst_5 {dimension_numbers = #tpu.dot_dimension_numbers<[1], [0], [0], [1], [0, 0, 1, 1], [], []>} : vector<16x256xbf16>, vector<256x256xbf16>, vector<16x256xf32> -> vector<16x256xf32>
    %c0_6 = arith.constant 0 : index
    %c0_7 = arith.constant 0 : index
    %7 = vector.load %arg3[%c0_6, %c0_7] : memref<16x256xf32, #tpu.memory_space<vmem>>, vector<16x256xf32>
    tpu.vector_store %arg3[%c0_6, %c0_7], %6 {strides = array<i32>} : memref<16x256xf32, #tpu.memory_space<vmem>>, vector<16x256xf32>,
    return
  }
}

</mosaic_0001>

<llo_original>
// kernel: tpu_custom_call.1
$region0: #{tpu_custom_call.1}
  #allocation0 [shape = 'u32[]', space=smem, size = 0x4, offset = 0x4, fixed_abs, tag = 'smem constant byte address 0x4 - core index']
  #allocation1 [shape = 'u32[144,128]{1,0:T(1,128)}', space=vmem, size = 0x12000, scoped, tag = 'internal scratch']
  %s0 = inlined_call_operand.hbm [shape: f8e4m3fn[32,128], index: 0, kind: input, shape index: {}]
  %s1 = inlined_call_operand.hbm [shape: f32[32,128], index: 1, kind: output, shape index: {}]
  %s2 = sld [smem:[#allocation0]]
  $region18: #{tpu_custom_call.1} parent=0
    _
  %s4 = ssub.s32 1, %s2
  %s5 = scalar_select 0, %s4, %s2
  $region1: #{tpu_custom_call.1} parent=0
    #allocation2 [shape = 'u8[4096]{0}', space=vmem, size = 0x1000, scoped, tag = 'input window, operand 0, single buffered']
    #allocation3 [shape = 's32[1]{0}', space=sflag, size = 0x4, scoped, tag = 'scoped memory for tpu_custom_call.1']
    #allocation4 [shape = 's32[1]{0}', space=sflag, size = 0x4, scoped, tag = 'scoped memory for tpu_custom_call.1']
    #allocation5 [shape = 'u8[16384]{0}', space=vmem, size = 0x4000, scoped, tag = 'output window, operand 0, single buffered']
    %6 = vsyncpa [#allocation3], 0
    %7 = vsyncpa [#allocation4], 0
    // Predicated region
    $region2: #{tpu_custom_call.1} parent=1 // pred_check
      _
    $region3: #{tpu_custom_call.1} parent=1 // pred_check_branch
      %9 = sbr.rel (0) target = $region5
    $region4: #{tpu_custom_call.1} parent=1 // pred_region
      %s11 = ssub.s32 128, 128
      %12 = vsyncadd [#allocation3], %s11
      %s14 = sshll.u32 [#allocation2], 4
      %s15 = int_to_ptr.vmem [resolvable:$true] %s14
      %17 = dma.hbm_to_vmem [thread:$0]  %s0, 128, %s15, [#allocation3]
    $region5: #{tpu_custom_call.1} parent=1 // pred_fallthru
      _
    // Predicated region
    $region6: #{tpu_custom_call.1} parent=1 // pred_check
      _
    $region7: #{tpu_custom_call.1} parent=1 // pred_check_branch
      %19 = sbr.rel (0) target = $region9
    $region8: #{tpu_custom_call.1} parent=1 // pred_region
      %20 = dma.done [#allocation3], 128
    $region9: #{tpu_custom_call.1} parent=1 // pred_fallthru
      _
    %v21 = vld [vmem:[#allocation2] sm:$0xff]
    %v22 = vunpack.c.l.f8e4m3fn %v21
    %v23 = vunpack.c.h.f8e4m3fn %v21
    %v24 = vunpack.c.l.bf16 %v22
    %v25 = vunpack.c.h.bf16 %v22
    %v26 = vunpack.c.l.bf16 %v23
    %v27 = vunpack.c.h.bf16 %v23
    %28 = vst [vmem:[#allocation5] sm:$0xff] %v24
    %29 = vst [vmem:[#allocation5 + $0x8] sm:$0xff] %v25
    %30 = vst [vmem:[#allocation5 + $0x10] sm:$0xff] %v26
    %31 = vst [vmem:[#allocation5 + $0x18] sm:$0xff] %v27
    // Predicated region
    $region10: #{tpu_custom_call.1} parent=1 // pred_check
      _
    $region11: #{tpu_custom_call.1} parent=1 // pred_check_branch
      %33 = sbr.rel (0) target = $region13
    $region12: #{tpu_custom_call.1} parent=1 // pred_region
      %s35 = ssub.s32 512, 512
      %36 = vsyncadd [#allocation4], %s35
      %s37 = sshll.u32 [#allocation5], 4
      %s38 = int_to_ptr.vmem [resolvable:$true] %s37
      %43 = dma.vmem_to_hbm [thread:$0]  %s38, 512, %s1, [#allocation4], 128, 128, 8
    $region13: #{tpu_custom_call.1} parent=1 // pred_fallthru
      _
    // Predicated region
    $region14: #{tpu_custom_call.1} parent=1 // pred_check
      _
    $region15: #{tpu_custom_call.1} parent=1 // pred_check_branch
      %45 = sbr.rel (0) target = $region17
    $region16: #{tpu_custom_call.1} parent=1 // pred_region
      %46 = dma.done [#allocation4], 512
    $region17: #{tpu_custom_call.1} parent=1 // pred_fallthru
      _
    %47 = vsyncpa [#allocation3], 1
    %48 = vsyncpa [#allocation4], 1

// kernel: _sparsified_forward.1
$region0: #{_sparsified_forward.1}
  #allocation0 [shape = 'u32[]', space=smem, size = 0x4, offset = 0x4, fixed_abs, tag = 'smem constant byte address 0x4 - core index']
  #allocation1 [shape = 'u32[144,128]{1,0:T(1,128)}', space=vmem, size = 0x12000, scoped, tag = 'internal scratch']
  %s0 = inlined_call_operand.vmem [shape: f32[16,384], index: 0, kind: input, shape index: {}]
  %s1 = inlined_call_operand.hbm [shape: bf16[384,256], index: 1, kind: input, shape index: {}]
  %s2 = inlined_call_operand.hbm [shape: bf16[256,256], index: 2, kind: input, shape index: {}]
  %s3 = inlined_call_operand.vmem [shape: f32[16,256], index: 3, kind: output, shape index: {}]
  %s4 = sld [smem:[#allocation0]]
  $region30: #{_sparsified_forward.1} parent=0
    _
  %s6 = ssub.s32 1, %s4
  %s7 = scalar_select 0, %s6, %s4
  $region1: #{_sparsified_forward.1} parent=0
    #allocation2 [shape = 'u8[196608]{0}', space=vmem, size = 0x30000, scoped, tag = 'input window, operand 1, single buffered']
    #allocation3 [shape = 's32[1]{0}', space=sflag, size = 0x4, scoped, tag = 'scoped memory for _sparsified_forward.1']
    #allocation4 [shape = 'u8[131072]{0}', space=vmem, size = 0x20000, scoped, tag = 'input window, operand 2, single buffered']
    #allocation5 [shape = 's32[1]{0}', space=sflag, size = 0x4, scoped, tag = 'scoped memory for _sparsified_forward.1']
    %8 = vsyncpa [#allocation3], 0
    %9 = vsyncpa [#allocation5], 0
    // Predicated region
    $region2: #{_sparsified_forward.1} parent=1 // pred_check
      _
    $region3: #{_sparsified_forward.1} parent=1 // pred_check_branch
      %11 = sbr.rel (0) target = $region5
    $region4: #{_sparsified_forward.1} parent=1 // pred_region
      _
    $region5: #{_sparsified_forward.1} parent=1 // pred_fallthru
      _
    // Predicated region
    $region6: #{_sparsified_forward.1} parent=1 // pred_check
      _
    $region7: #{_sparsified_forward.1} parent=1 // pred_check_branch
      %13 = sbr.rel (0) target = $region9
    $region8: #{_sparsified_forward.1} parent=1 // pred_region
      %s15 = ssub.s32 6144, 6144
      %16 = vsyncadd [#allocation3], %s15
      %s17 = sshll.u32 [#allocation2], 4
      %s18 = int_to_ptr.vmem [resolvable:$true] %s17
      %23 = dma.hbm_to_vmem [thread:$0]  %s1, 6144, %s18, [#allocation3], 128, 128, 8
    $region9: #{_sparsified_forward.1} parent=1 // pred_fallthru
      _
    // Predicated region
    $region10: #{_sparsified_forward.1} parent=1 // pred_check
      _
    $region11: #{_sparsified_forward.1} parent=1 // pred_check_branch
      %25 = sbr.rel (0) target = $region13
    $region12: #{_sparsified_forward.1} parent=1 // pred_region
      %s27 = ssub.s32 4096, 4096
      %28 = vsyncadd [#allocation5], %s27
      %s29 = sshll.u32 [#allocation4], 4
      %s30 = int_to_ptr.vmem [resolvable:$true] %s29
      %35 = dma.hbm_to_vmem [thread:$0]  %s2, 4096, %s30, [#allocation5], 128, 128, 8
    $region13: #{_sparsified_forward.1} parent=1 // pred_fallthru
      _
    // Predicated region
    $region14: #{_sparsified_forward.1} parent=1 // pred_check
      _
    $region15: #{_sparsified_forward.1} parent=1 // pred_check_branch
      %37 = sbr.rel (0) target = $region17
    $region16: #{_sparsified_forward.1} parent=1 // pred_region
      %38 = dma.done [#allocation3], 6144
    $region17: #{_sparsified_forward.1} parent=1 // pred_fallthru
      _
    // Predicated region
    $region18: #{_sparsified_forward.1} parent=1 // pred_check
      _
    $region19: #{_sparsified_forward.1} parent=1 // pred_check_branch
      %40 = sbr.rel (0) target = $region21
    $region20: #{_sparsified_forward.1} parent=1 // pred_region
      %41 = dma.done [#allocation5], 4096
    $region21: #{_sparsified_forward.1} parent=1 // pred_fallthru
      _
    %v43 = vld [vmem:[%s0] sm:$0xff]
    %v44 = vld [vmem:[%s0 + $0x8] sm:$0xff]
    %v45 = vld [vmem:[%s0 + $0x10] sm:$0xff]
    %v46 = vld [vmem:[%s0 + $0x18] sm:$0xff]
    %v47 = vld [vmem:[%s0 + $0x20] sm:$0xff]
    %v48 = vld [vmem:[%s0 + $0x28] sm:$0xff]
    %v49 = vpack.c.bf16 %v46, %v43
    %v50 = vpack.c.bf16 %v47, %v44
    %v51 = vpack.c.bf16 %v48, %v45
    %v52 = vld [vmem:[#allocation2] sm:$0xff]
    %v53 = vld [vmem:[#allocation2 + $0x8] sm:$0xff]
    %v54 = vld [vmem:[#allocation2 + $0x10] sm:$0xff]
    %v55 = vld [vmem:[#allocation2 + $0x18] sm:$0xff]
    %v56 = vld [vmem:[#allocation2 + $0x20] sm:$0xff]
    %v57 = vld [vmem:[#allocation2 + $0x28] sm:$0xff]
    %v58 = vld [vmem:[#allocation2 + $0x30] sm:$0xff]
    %v59 = vld [vmem:[#allocation2 + $0x38] sm:$0xff]
    %v60 = vld [vmem:[#allocation2 + $0x40] sm:$0xff]
    %v61 = vld [vmem:[#allocation2 + $0x48] sm:$0xff]
    %v62 = vld [vmem:[#allocation2 + $0x50] sm:$0xff]
    %v63 = vld [vmem:[#allocation2 + $0x58] sm:$0xff]
    %v64 = vld [vmem:[#allocation2 + $0x60] sm:$0xff]
    %v65 = vld [vmem:[#allocation2 + $0x68] sm:$0xff]
    %v66 = vld [vmem:[#allocation2 + $0x70] sm:$0xff]
    %v67 = vld [vmem:[#allocation2 + $0x78] sm:$0xff]
    %v68 = vld [vmem:[#allocation2 + $0x80] sm:$0xff]
    %v69 = vld [vmem:[#allocation2 + $0x88] sm:$0xff]
    %v70 = vld [vmem:[#allocation2 + $0x90] sm:$0xff]
    %v71 = vld [vmem:[#allocation2 + $0x98] sm:$0xff]
    %v72 = vld [vmem:[#allocation2 + $0xa0] sm:$0xff]
    %v73 = vld [vmem:[#allocation2 + $0xa8] sm:$0xff]
    %v74 = vld [vmem:[#allocation2 + $0xb0] sm:$0xff]
    %v75 = vld [vmem:[#allocation2 + $0xb8] sm:$0xff]
    %v76 = vld [vmem:[#allocation2 + $0xc0] sm:$0xff]
    %v77 = vld [vmem:[#allocation2 + $0xc8] sm:$0xff]
    %v78 = vld [vmem:[#allocation2 + $0xd0] sm:$0xff]
    %v79 = vld [vmem:[#allocation2 + $0xd8] sm:$0xff]
    %v80 = vld [vmem:[#allocation2 + $0xe0] sm:$0xff]
    %v81 = vld [vmem:[#allocation2 + $0xe8] sm:$0xff]
    %v82 = vld [vmem:[#allocation2 + $0xf0] sm:$0xff]
    %v83 = vld [vmem:[#allocation2 + $0xf8] sm:$0xff]
    %v84 = vld [vmem:[#allocation2 + $0x100] sm:$0xff]
    %v85 = vld [vmem:[#allocation2 + $0x108] sm:$0xff]
    %v86 = vld [vmem:[#allocation2 + $0x110] sm:$0xff]
    %v87 = vld [vmem:[#allocation2 + $0x118] sm:$0xff]
    %v88 = vld [vmem:[#allocation2 + $0x120] sm:$0xff]
    %v89 = vld [vmem:[#allocation2 + $0x128] sm:$0xff]
    %v90 = vld [vmem:[#allocation2 + $0x130] sm:$0xff]
    %v91 = vld [vmem:[#allocation2 + $0x138] sm:$0xff]
    %v92 = vld [vmem:[#allocation2 + $0x140] sm:$0xff]
    %v93 = vld [vmem:[#allocation2 + $0x148] sm:$0xff]
    %v94 = vld [vmem:[#allocation2 + $0x150] sm:$0xff]
    %v95 = vld [vmem:[#allocation2 + $0x158] sm:$0xff]
    %v96 = vld [vmem:[#allocation2 + $0x160] sm:$0xff]
    %v97 = vld [vmem:[#allocation2 + $0x168] sm:$0xff]
    %v98 = vld [vmem:[#allocation2 + $0x170] sm:$0xff]
    %v99 = vld [vmem:[#allocation2 + $0x178] sm:$0xff]
    %v148 = vunpack.c.l.b16 %v52
    %v149 = vunpack.c.h.b16 %v52
    %v150 = vunpack.c.l.b16 %v53
    %v151 = vunpack.c.h.b16 %v53
    %v152 = vunpack.c.l.b16 %v54
    %v153 = vunpack.c.h.b16 %v54
    %v154 = vunpack.c.l.b16 %v55
    %v155 = vunpack.c.h.b16 %v55
    %v156 = vunpack.c.l.b16 %v56
    %v157 = vunpack.c.h.b16 %v56
    %v158 = vunpack.c.l.b16 %v57
    %v159 = vunpack.c.h.b16 %v57
    %v160 = vunpack.c.l.b16 %v58
    %v161 = vunpack.c.h.b16 %v58
    %v162 = vunpack.c.l.b16 %v59
    %v163 = vunpack.c.h.b16 %v59
    %v164 = vunpack.c.l.b16 %v60
    %v165 = vunpack.c.h.b16 %v60
    %v166 = vunpack.c.l.b16 %v61
    %v167 = vunpack.c.h.b16 %v61
    %v168 = vunpack.c.l.b16 %v62
    %v169 = vunpack.c.h.b16 %v62
    %v170 = vunpack.c.l.b16 %v63
    %v171 = vunpack.c.h.b16 %v63
    %v172 = vunpack.c.l.b16 %v64
    %v173 = vunpack.c.h.b16 %v64
    %v174 = vunpack.c.l.b16 %v65
    %v175 = vunpack.c.h.b16 %v65
    %v176 = vunpack.c.l.b16 %v66
    %v177 = vunpack.c.h.b16 %v66
    %v178 = vunpack.c.l.b16 %v67
    %v179 = vunpack.c.h.b16 %v67
    %v180 = vunpack.c.l.b16 %v68
    %v181 = vunpack.c.h.b16 %v68
    %v182 = vunpack.c.l.b16 %v69
    %v183 = vunpack.c.h.b16 %v69
    %v184 = vunpack.c.l.b16 %v70
    %v185 = vunpack.c.h.b16 %v70
    %v186 = vunpack.c.l.b16 %v71
    %v187 = vunpack.c.h.b16 %v71
    %v188 = vunpack.c.l.b16 %v72
    %v189 = vunpack.c.h.b16 %v72
    %v190 = vunpack.c.l.b16 %v73
    %v191 = vunpack.c.h.b16 %v73
    %v192 = vunpack.c.l.b16 %v74
    %v193 = vunpack.c.h.b16 %v74
    %v194 = vunpack.c.l.b16 %v75
    %v195 = vunpack.c.h.b16 %v75
    %v196 = vunpack.c.l.b16 %v76
    %v197 = vunpack.c.h.b16 %v76
    %v198 = vunpack.c.l.b16 %v77
    %v199 = vunpack.c.h.b16 %v77
    %v200 = vunpack.c.l.b16 %v78
    %v201 = vunpack.c.h.b16 %v78
    %v202 = vunpack.c.l.b16 %v79
    %v203 = vunpack.c.h.b16 %v79
    %v204 = vunpack.c.l.b16 %v80
    %v205 = vunpack.c.h.b16 %v80
    %v206 = vunpack.c.l.b16 %v81
    %v207 = vunpack.c.h.b16 %v81
    %v208 = vunpack.c.l.b16 %v82
    %v209 = vunpack.c.h.b16 %v82
    %v210 = vunpack.c.l.b16 %v83
    %v211 = vunpack.c.h.b16 %v83
    %v212 = vunpack.c.l.b16 %v84
    %v213 = vunpack.c.h.b16 %v84
    %v214 = vunpack.c.l.b16 %v85
    %v215 = vunpack.c.h.b16 %v85
    %v216 = vunpack.c.l.b16 %v86
    %v217 = vunpack.c.h.b16 %v86
    %v218 = vunpack.c.l.b16 %v87
    %v219 = vunpack.c.h.b16 %v87
    %v220 = vunpack.c.l.b16 %v88
    %v221 = vunpack.c.h.b16 %v88
    %v222 = vunpack.c.l.b16 %v89
    %v223 = vunpack.c.h.b16 %v89
    %v224 = vunpack.c.l.b16 %v90
    %v225 = vunpack.c.h.b16 %v90
    %v226 = vunpack.c.l.b16 %v91
    %v227 = vunpack.c.h.b16 %v91
    %v228 = vunpack.c.l.b16 %v92
    %v229 = vunpack.c.h.b16 %v92
    %v230 = vunpack.c.l.b16 %v93
    %v231 = vunpack.c.h.b16 %v93
    %v232 = vunpack.c.l.b16 %v94
    %v233 = vunpack.c.h.b16 %v94
    %v234 = vunpack.c.l.b16 %v95
    %v235 = vunpack.c.h.b16 %v95
    %v236 = vunpack.c.l.b16 %v96
    %v237 = vunpack.c.h.b16 %v96
    %v238 = vunpack.c.l.b16 %v97
    %v239 = vunpack.c.h.b16 %v97
    %v240 = vunpack.c.l.b16 %v98
    %v241 = vunpack.c.h.b16 %v98
    %v242 = vunpack.c.l.b16 %v99
    %v243 = vunpack.c.h.b16 %v99
    %v244 = vpack.c.b16 %v150, %v148
    %v245 = vpack.c.b16 %v151, %v149
    %v246 = vpack.c.b16 %v154, %v152
    %v247 = vpack.c.b16 %v155, %v153
    %v248 = vpack.c.b16 %v158, %v156
    %v249 = vpack.c.b16 %v159, %v157
    %v250 = vpack.c.b16 %v162, %v160
    %v251 = vpack.c.b16 %v163, %v161
    %v252 = vpack.c.b16 %v166, %v164
    %v253 = vpack.c.b16 %v167, %v165
    %v254 = vpack.c.b16 %v170, %v168
    %v255 = vpack.c.b16 %v171, %v169
    %v256 = vpack.c.b16 %v174, %v172
    %v257 = vpack.c.b16 %v175, %v173
    %v258 = vpack.c.b16 %v178, %v176
    %v259 = vpack.c.b16 %v179, %v177
    %v260 = vpack.c.b16 %v182, %v180
    %v261 = vpack.c.b16 %v183, %v181
    %v262 = vpack.c.b16 %v186, %v184
    %v263 = vpack.c.b16 %v187, %v185
    %v264 = vpack.c.b16 %v190, %v188
    %v265 = vpack.c.b16 %v191, %v189
    %v266 = vpack.c.b16 %v194, %v192
    %v267 = vpack.c.b16 %v195, %v193
    %v268 = vpack.c.b16 %v198, %v196
    %v269 = vpack.c.b16 %v199, %v197
    %v270 = vpack.c.b16 %v202, %v200
    %v271 = vpack.c.b16 %v203, %v201
    %v272 = vpack.c.b16 %v206, %v204
    %v273 = vpack.c.b16 %v207, %v205
    %v274 = vpack.c.b16 %v210, %v208
    %v275 = vpack.c.b16 %v211, %v209
    %v276 = vpack.c.b16 %v214, %v212
    %v277 = vpack.c.b16 %v215, %v213
    %v278 = vpack.c.b16 %v218, %v216
    %v279 = vpack.c.b16 %v219, %v217
    %v280 = vpack.c.b16 %v222, %v220
    %v281 = vpack.c.b16 %v223, %v221
    %v282 = vpack.c.b16 %v226, %v224
    %v283 = vpack.c.b16 %v227, %v225
    %v284 = vpack.c.b16 %v230, %v228
    %v285 = vpack.c.b16 %v231, %v229
    %v286 = vpack.c.b16 %v234, %v232
    %v287 = vpack.c.b16 %v235, %v233
    %v288 = vpack.c.b16 %v238, %v236
    %v289 = vpack.c.b16 %v239, %v237
    %v290 = vpack.c.b16 %v242, %v240
    %v291 = vpack.c.b16 %v243, %v241
    %340 = vmatprep.subr.bf16.mxu0 %v245
    %341 = vmatpush1.bf16.msra.mxu0 %v244
    %342 = vmatprep.subr.bf16.mxu0 %v247
    %343 = vmatpush1.bf16.msra.mxu0 %v246
    %344 = vmatprep.subr.bf16.mxu0 %v249
    %345 = vmatpush1.bf16.msra.mxu0 %v248
    %346 = vmatprep.subr.bf16.mxu0 %v251
    %347 = vmatpush1.bf16.msra.mxu0 %v250
    %348 = vmatprep.subr.bf16.mxu0 %v253
    %349 = vmatpush1.bf16.msra.mxu0 %v252
    %350 = vmatprep.subr.bf16.mxu0 %v255
    %351 = vmatpush1.bf16.msra.mxu0 %v254
    %352 = vmatprep.subr.bf16.mxu0 %v257
    %353 = vmatpush1.bf16.msra.mxu0 %v256
    %354 = vmatprep.subr.bf16.mxu0 %v259
    %355 = vmatpush1.bf16.msra.mxu0 %v258
    %356 = vmatprep.subr.bf16.mxu0 %v261
    %357 = vmatpush1.bf16.msra.mxu0 %v260
    %358 = vmatprep.subr.bf16.mxu0 %v263
    %359 = vmatpush1.bf16.msra.mxu0 %v262
    %360 = vmatprep.subr.bf16.mxu0 %v265
    %361 = vmatpush1.bf16.msra.mxu0 %v264
    %362 = vmatprep.subr.bf16.mxu0 %v267
    %363 = vmatpush1.bf16.msra.mxu0 %v266
    %364 = vmatprep.subr.bf16.mxu0 %v269
    %365 = vmatpush1.bf16.msra.mxu0 %v268
    %366 = vmatprep.subr.bf16.mxu0 %v271
    %367 = vmatpush1.bf16.msra.mxu0 %v270
    %368 = vmatprep.subr.bf16.mxu0 %v273
    %369 = vmatpush1.bf16.msra.mxu0 %v272
    %370 = vmatprep.subr.bf16.mxu0 %v275
    %371 = vmatpush1.bf16.msra.mxu0 %v274
    %372 = vmatprep.mubr.bf16.mxu0 %v50
    %373 = vmatmul.mubr.bf16.gmra.mrb[0].mxu0 %v49
    %v374 = vpop.f32.mrb[0].mxu0
    %v375 = vadd.f32 0.0, %v374
    %v376 = vpop.f32.mrb[0].mxu0
    %v377 = vadd.f32 0.0, %v376
    %v378 = vpop.f32.mrb[0].mxu0
    %v379 = vadd.f32 0.0, %v378
    %v380 = vpop.f32.mrb[0].mxu0
    %v381 = vadd.f32 0.0, %v380
    %382 = vdwg.mxu0
    %383 = vmatprep.subr.bf16.mxu0 %v277
    %384 = vmatpush1.bf16.msra.mxu0 %v276
    %385 = vmatprep.subr.bf16.mxu0 %v279
    %386 = vmatpush1.bf16.msra.mxu0 %v278
    %387 = vmatprep.subr.bf16.mxu0 %v281
    %388 = vmatpush1.bf16.msra.mxu0 %v280
    %389 = vmatprep.subr.bf16.mxu0 %v283
    %390 = vmatpush1.bf16.msra.mxu0 %v282
    %391 = vmatprep.subr.bf16.mxu0 %v285
    %392 = vmatpush1.bf16.msra.mxu0 %v284
    %393 = vmatprep.subr.bf16.mxu0 %v287
    %394 = vmatpush1.bf16.msra.mxu0 %v286
    %395 = vmatprep.subr.bf16.mxu0 %v289
    %396 = vmatpush1.bf16.msra.mxu0 %v288
    %397 = vmatprep.subr.bf16.mxu0 %v291
    %398 = vmatpush1.bf16.msra.mxu0 %v290
    %399 = vmatprep.subr.bf16.mxu0 0
    %400 = vmatpush1.bf16.msra.mxu0 0
    %401 = vmatprep.subr.bf16.mxu0 0
    %402 = vmatpush1.bf16.msra.mxu0 0
    %403 = vmatprep.subr.bf16.mxu0 0
    %404 = vmatpush1.bf16.msra.mxu0 0
    %405 = vmatprep.subr.bf16.mxu0 0
    %406 = vmatpush1.bf16.msra.mxu0 0
    %407 = vmatprep.subr.bf16.mxu0 0
    %408 = vmatpush1.bf16.msra.mxu0 0
    %409 = vmatprep.subr.bf16.mxu0 0
    %410 = vmatpush1.bf16.msra.mxu0 0
    %411 = vmatprep.subr.bf16.mxu0 0
    %412 = vmatpush1.bf16.msra.mxu0 0
    %413 = vmatprep.subr.bf16.mxu0 0
    %414 = vmatpush1.bf16.msra.mxu0 0
    %415 = vmatprep.mubr.bf16.mxu0 0
    %416 = vmatmul.mubr.bf16.gmra.mrb[0].mxu0 %v51
    %v417 = vpop.f32.mrb[0].mxu0
    %v418 = vadd.f32 %v375, %v417
    %v419 = vpop.f32.mrb[0].mxu0
    %v420 = vadd.f32 %v377, %v419
    %v421 = vpop.f32.mrb[0].mxu0
    %v422 = vadd.f32 %v379, %v421
    %v423 = vpop.f32.mrb[0].mxu0
    %v424 = vadd.f32 %v381, %v423
    %425 = vdwg.mxu0
    %v426 = vpack.c.bf16 %v422, %v418
    %v427 = vpack.c.bf16 %v424, %v420
    %v428 = vld [vmem:[#allocation4] sm:$0xff]
    %v429 = vld [vmem:[#allocation4 + $0x8] sm:$0xff]
    %v430 = vld [vmem:[#allocation4 + $0x10] sm:$0xff]
    %v431 = vld [vmem:[#allocation4 + $0x18] sm:$0xff]
    %v432 = vld [vmem:[#allocation4 + $0x20] sm:$0xff]
    %v433 = vld [vmem:[#allocation4 + $0x28] sm:$0xff]
    %v434 = vld [vmem:[#allocation4 + $0x30] sm:$0xff]
    %v435 = vld [vmem:[#allocation4 + $0x38] sm:$0xff]
    %v436 = vld [vmem:[#allocation4 + $0x40] sm:$0xff]
    %v437 = vld [vmem:[#allocation4 + $0x48] sm:$0xff]
    %v438 = vld [vmem:[#allocation4 + $0x50] sm:$0xff]
    %v439 = vld [vmem:[#allocation4 + $0x58] sm:$0xff]
    %v440 = vld [vmem:[#allocation4 + $0x60] sm:$0xff]
    %v441 = vld [vmem:[#allocation4 + $0x68] sm:$0xff]
    %v442 = vld [vmem:[#allocation4 + $0x70] sm:$0xff]
    %v443 = vld [vmem:[#allocation4 + $0x78] sm:$0xff]
    %v444 = vld [vmem:[#allocation4 + $0x80] sm:$0xff]
    %v445 = vld [vmem:[#allocation4 + $0x88] sm:$0xff]
    %v446 = vld [vmem:[#allocation4 + $0x90] sm:$0xff]
    %v447 = vld [vmem:[#allocation4 + $0x98] sm:$0xff]
    %v448 = vld [vmem:[#allocation4 + $0xa0] sm:$0xff]
    %v449 = vld [vmem:[#allocation4 + $0xa8] sm:$0xff]
    %v450 = vld [vmem:[#allocation4 + $0xb0] sm:$0xff]
    %v451 = vld [vmem:[#allocation4 + $0xb8] sm:$0xff]
    %v452 = vld [vmem:[#allocation4 + $0xc0] sm:$0xff]
    %v453 = vld [vmem:[#allocation4 + $0xc8] sm:$0xff]
    %v454 = vld [vmem:[#allocation4 + $0xd0] sm:$0xff]
    %v455 = vld [vmem:[#allocation4 + $0xd8] sm:$0xff]
    %v456 = vld [vmem:[#allocation4 + $0xe0] sm:$0xff]
    %v457 = vld [vmem:[#allocation4 + $0xe8] sm:$0xff]
    %v458 = vld [vmem:[#allocation4 + $0xf0] sm:$0xff]
    %v459 = vld [vmem:[#allocation4 + $0xf8] sm:$0xff]
    %v492 = vunpack.c.l.b16 %v428
    %v493 = vunpack.c.h.b16 %v428
    %v494 = vunpack.c.l.b16 %v429
    %v495 = vunpack.c.h.b16 %v429
    %v496 = vunpack.c.l.b16 %v430
    %v497 = vunpack.c.h.b16 %v430
    %v498 = vunpack.c.l.b16 %v431
    %v499 = vunpack.c.h.b16 %v431
    %v500 = vunpack.c.l.b16 %v432
    %v501 = vunpack.c.h.b16 %v432
    %v502 = vunpack.c.l.b16 %v433
    %v503 = vunpack.c.h.b16 %v433
    %v504 = vunpack.c.l.b16 %v434
    %v505 = vunpack.c.h.b16 %v434
    %v506 = vunpack.c.l.b16 %v435
    %v507 = vunpack.c.h.b16 %v435
    %v508 = vunpack.c.l.b16 %v436
    %v509 = vunpack.c.h.b16 %v436
    %v510 = vunpack.c.l.b16 %v437
    %v511 = vunpack.c.h.b16 %v437
    %v512 = vunpack.c.l.b16 %v438
    %v513 = vunpack.c.h.b16 %v438
    %v514 = vunpack.c.l.b16 %v439
    %v515 = vunpack.c.h.b16 %v439
    %v516 = vunpack.c.l.b16 %v440
    %v517 = vunpack.c.h.b16 %v440
    %v518 = vunpack.c.l.b16 %v441
    %v519 = vunpack.c.h.b16 %v441
    %v520 = vunpack.c.l.b16 %v442
    %v521 = vunpack.c.h.b16 %v442
    %v522 = vunpack.c.l.b16 %v443
    %v523 = vunpack.c.h.b16 %v443
    %v524 = vunpack.c.l.b16 %v444
    %v525 = vunpack.c.h.b16 %v444
    %v526 = vunpack.c.l.b16 %v445
    %v527 = vunpack.c.h.b16 %v445
    %v528 = vunpack.c.l.b16 %v446
    %v529 = vunpack.c.h.b16 %v446
    %v530 = vunpack.c.l.b16 %v447
    %v531 = vunpack.c.h.b16 %v447
    %v532 = vunpack.c.l.b16 %v448
    %v533 = vunpack.c.h.b16 %v448
    %v534 = vunpack.c.l.b16 %v449
    %v535 = vunpack.c.h.b16 %v449
    %v536 = vunpack.c.l.b16 %v450
    %v537 = vunpack.c.h.b16 %v450
    %v538 = vunpack.c.l.b16 %v451
    %v539 = vunpack.c.h.b16 %v451
    %v540 = vunpack.c.l.b16 %v452
    %v541 = vunpack.c.h.b16 %v452
    %v542 = vunpack.c.l.b16 %v453
    %v543 = vunpack.c.h.b16 %v453
    %v544 = vunpack.c.l.b16 %v454
    %v545 = vunpack.c.h.b16 %v454
    %v546 = vunpack.c.l.b16 %v455
    %v547 = vunpack.c.h.b16 %v455
    %v548 = vunpack.c.l.b16 %v456
    %v549 = vunpack.c.h.b16 %v456
    %v550 = vunpack.c.l.b16 %v457
    %v551 = vunpack.c.h.b16 %v457
    %v552 = vunpack.c.l.b16 %v458
    %v553 = vunpack.c.h.b16 %v458
    %v554 = vunpack.c.l.b16 %v459
    %v555 = vunpack.c.h.b16 %v459
    %v556 = vpack.c.b16 %v494, %v492
    %v557 = vpack.c.b16 %v495, %v493
    %v558 = vpack.c.b16 %v498, %v496
    %v559 = vpack.c.b16 %v499, %v497
    %v560 = vpack.c.b16 %v502, %v500
    %v561 = vpack.c.b16 %v503, %v501
    %v562 = vpack.c.b16 %v506, %v504
    %v563 = vpack.c.b16 %v507, %v505
    %v564 = vpack.c.b16 %v510, %v508
    %v565 = vpack.c.b16 %v511, %v509
    %v566 = vpack.c.b16 %v514, %v512
    %v567 = vpack.c.b16 %v515, %v513
    %v568 = vpack.c.b16 %v518, %v516
    %v569 = vpack.c.b16 %v519, %v517
    %v570 = vpack.c.b16 %v522, %v520
    %v571 = vpack.c.b16 %v523, %v521
    %v572 = vpack.c.b16 %v526, %v524
    %v573 = vpack.c.b16 %v527, %v525
    %v574 = vpack.c.b16 %v530, %v528
    %v575 = vpack.c.b16 %v531, %v529
    %v576 = vpack.c.b16 %v534, %v532
    %v577 = vpack.c.b16 %v535, %v533
    %v578 = vpack.c.b16 %v538, %v536
    %v579 = vpack.c.b16 %v539, %v537
    %v580 = vpack.c.b16 %v542, %v540
    %v581 = vpack.c.b16 %v543, %v541
    %v582 = vpack.c.b16 %v546, %v544
    %v583 = vpack.c.b16 %v547, %v545
    %v584 = vpack.c.b16 %v550, %v548
    %v585 = vpack.c.b16 %v551, %v549
    %v586 = vpack.c.b16 %v554, %v552
    %v587 = vpack.c.b16 %v555, %v553
    %620 = vmatprep.subr.bf16.mxu0 %v557
    %621 = vmatpush1.bf16.msra.mxu0 %v556
    %622 = vmatprep.subr.bf16.mxu0 %v559
    %623 = vmatpush1.bf16.msra.mxu0 %v558
    %624 = vmatprep.subr.bf16.mxu0 %v561
    %625 = vmatpush1.bf16.msra.mxu0 %v560
    %626 = vmatprep.subr.bf16.mxu0 %v563
    %627 = vmatpush1.bf16.msra.mxu0 %v562
    %628 = vmatprep.subr.bf16.mxu0 %v565
    %629 = vmatpush1.bf16.msra.mxu0 %v564
    %630 = vmatprep.subr.bf16.mxu0 %v567
    %631 = vmatpush1.bf16.msra.mxu0 %v566
    %632 = vmatprep.subr.bf16.mxu0 %v569
    %633 = vmatpush1.bf16.msra.mxu0 %v568
    %634 = vmatprep.subr.bf16.mxu0 %v571
    %635 = vmatpush1.bf16.msra.mxu0 %v570
    %636 = vmatprep.subr.bf16.mxu0 %v573
    %637 = vmatpush1.bf16.msra.mxu0 %v572
    %638 = vmatprep.subr.bf16.mxu0 %v575
    %639 = vmatpush1.bf16.msra.mxu0 %v574
    %640 = vmatprep.subr.bf16.mxu0 %v577
    %641 = vmatpush1.bf16.msra.mxu0 %v576
    %642 = vmatprep.subr.bf16.mxu0 %v579
    %643 = vmatpush1.bf16.msra.mxu0 %v578
    %644 = vmatprep.subr.bf16.mxu0 %v581
    %645 = vmatpush1.bf16.msra.mxu0 %v580
    %646 = vmatprep.subr.bf16.mxu0 %v583
    %647 = vmatpush1.bf16.msra.mxu0 %v582
    %648 = vmatprep.subr.bf16.mxu0 %v585
    %649 = vmatpush1.bf16.msra.mxu0 %v584
    %650 = vmatprep.subr.bf16.mxu0 %v587
    %651 = vmatpush1.bf16.msra.mxu0 %v586
    %652 = vmatprep.mubr.bf16.mxu0 %v427
    %653 = vmatmul.mubr.bf16.gmra.mrb[0].mxu0 %v426
    %v654 = vpop.f32.mrb[0].mxu0
    %v655 = vadd.f32 0.0, %v654
    %v656 = vpop.f32.mrb[0].mxu0
    %v657 = vadd.f32 0.0, %v656
    %v658 = vpop.f32.mrb[0].mxu0
    %v659 = vadd.f32 0.0, %v658
    %v660 = vpop.f32.mrb[0].mxu0
    %v661 = vadd.f32 0.0, %v660
    %662 = vdwg.mxu0
    %663 = vst [vmem:[%s3] sm:$0xff] %v655
    %664 = vst [vmem:[%s3 + $0x8] sm:$0xff] %v657
    %665 = vst [vmem:[%s3 + $0x10] sm:$0xff] %v659
    %666 = vst [vmem:[%s3 + $0x18] sm:$0xff] %v661
    // Predicated region
    $region22: #{_sparsified_forward.1} parent=1 // pred_check
      _
    $region23: #{_sparsified_forward.1} parent=1 // pred_check_branch
      %668 = sbr.rel (0) target = $region25
    $region24: #{_sparsified_forward.1} parent=1 // pred_region
      _
    $region25: #{_sparsified_forward.1} parent=1 // pred_fallthru
      _
    // Predicated region
    $region26: #{_sparsified_forward.1} parent=1 // pred_check
      _
    $region27: #{_sparsified_forward.1} parent=1 // pred_check_branch
      %670 = sbr.rel (0) target = $region29
    $region28: #{_sparsified_forward.1} parent=1 // pred_region
      _
    $region29: #{_sparsified_forward.1} parent=1 // pred_fallthru
      _
    %671 = vsyncpa [#allocation3], 1
    %672 = vsyncpa [#allocation5], 1

</llo_original>
